<compile_context>
chip_gen: v6e
topology: v6e:2x2x1
jax: 0.10.0
libtpu: 0.0.40
codegen_flags: <defaults>
</compile_context>

<pallas_src>
import jax
import jax.numpy as jnp
from jax.experimental import pallas as pl
from jax.experimental.pallas import tpu as pltpu


def _round_up(a, b):
    return (a + b - 1) // b * b


def _conv1x1(w, b, v):
    """w: (C, C) [out, in], b: (C, 1), v: (C, TM) f32  ->  w @ v + b (f32)."""
    c_dim = v.shape[0]
    if c_dim <= 16:
        # Tiny channel count: C broadcast FMAs on the (otherwise idle) VPU.
        # An MXU contraction would only use C of its 128/256 rows and just
        # add push/pop latency to a memory-bound loop.
        acc = w[:, 0:1] * v[0:1, :]
        for c in range(1, c_dim):
            acc = acc + w[:, c:c + 1] * v[c:c + 1, :]
        return acc + b
    # Larger C: use the MXU.
    return jnp.dot(w, v, preferred_element_type=jnp.float32) + b


def _fusion_kernel(x_ref, w1_ref, b1_ref, w2_ref, b2_ref, o_ref):
    # x_ref/o_ref: (C, TM) tile (batch dim squeezed); lane axis = spatial M.
    # w*_ref: (C, C) as [out, in]; b*_ref: (C, 1).
    x = x_ref[...].astype(jnp.float32)
    h = _conv1x1(w1_ref[...].astype(jnp.float32),
                 b1_ref[...].astype(jnp.float32), x)
    h = jnp.maximum(h, 0.0)                                    # ReLU
    y = _conv1x1(w2_ref[...].astype(jnp.float32),
                 b2_ref[...].astype(jnp.float32), h)
    o_ref[...] = (x + y).astype(o_ref.dtype)                   # residual add


def fusion_layer(x_nchw, w1, b1, w2, b2, *, tm=512):
    """Fusion_layer forward: x + Conv1x1(ReLU(Conv1x1(x))).

    x_nchw: (B, C, H, W); w1/w2: (C, C, 1, 1) PyTorch conv weights; b1/b2: (C,).
    """
    B, C, H, W = x_nchw.shape
    HW = H * W

    # NCHW -> (B, C, H*W): a pure reshape; no transpose, no extra HBM pass.
    x3d = x_nchw.reshape(B, C, HW)

    # Lane tile: multiple of 128, no larger than the (padded) spatial row.
    tm_eff = _round_up(min(tm, _round_up(HW, 128)), 128)
    hw_pad = _round_up(HW, tm_eff)
    if hw_pad != HW:
        x3d = jnp.pad(x3d, ((0, 0), (0, 0), (0, hw_pad - HW)))

    # Conv2d(C, C, 1) weight (out, in, 1, 1) -> (out, in); used directly as
    # y = W @ x with x laid out (in, M), so no weight transpose either.
    w1_m = w1[:, :, 0, 0]
    w2_m = w2[:, :, 0, 0]
    b1_m = b1.reshape(C, 1)
    b2_m = b2.reshape(C, 1)

    # Constant-index weight/bias inputs: single-buffer them once C is large
    # enough for double-buffering to be meaningful VMEM waste (v7x: 64 MiB).
    if C >= 128:
        def _const_spec(shape):
            return pl.BlockSpec(shape, lambda b, m: (0, 0),
                                pipeline_mode=pl.Buffered(1))
    else:
        def _const_spec(shape):
            return pl.BlockSpec(shape, lambda b, m: (0, 0))

    grid = (B, hw_pad // tm_eff)
    itemsize = jnp.dtype(x_nchw.dtype).itemsize
    cost = pl.CostEstimate(
        flops=4 * B * HW * C * C,                    # two CxC matmuls / pixel
        transcendentals=0,
        bytes_accessed=(2 * B * C * HW + 2 * C * C + 2 * C) * itemsize,
    )

    out3d = pl.pallas_call(
        _fusion_kernel,
        out_shape=jax.ShapeDtypeStruct((B, C, hw_pad), x3d.dtype),
        grid_spec=pltpu.PrefetchScalarGridSpec(
            num_scalar_prefetch=0,
            grid=grid,
            in_specs=[
                pl.BlockSpec((None, C, tm_eff), lambda b, m: (b, 0, m)),  # x
                _const_spec((C, C)),                                      # w1
                _const_spec((C, 1)),                                      # b1
                _const_spec((C, C)),                                      # w2
                _const_spec((C, 1)),                                      # b2
            ],
            out_specs=pl.BlockSpec((None, C, tm_eff), lambda b, m: (b, 0, m)),
        ),
        compiler_params=pltpu.CompilerParams(
            dimension_semantics=("parallel", "parallel")),
        cost_estimate=cost,
    )(x3d, w1_m, b1_m, w2_m, b2_m)

    if hw_pad != HW:
        out3d = out3d[:, :, :HW]
    return out3d.reshape(B, C, H, W)


def _reference(x, w1, b1, w2, b2):
    # Pure-JAX reference: 1x1 convs as einsum over channels (NCHW semantics).
    h = jnp.einsum("bchw,oc->bohw", x, w1[:, :, 0, 0]) + b1[None, :, None, None]
    h = jnp.maximum(h, 0.0)
    y = jnp.einsum("bchw,oc->bohw", h, w2[:, :, 0, 0]) + b2[None, :, None, None]
    return x + y


if __name__ == "__main__":
    # TODO(synk): only the Fusion_layer sub-block of the full Transformer is
    # implemented as a Pallas kernel here (per the original scope/review).
    B, C, H, W = 2, 4, 16, 16
    key = jax.random.PRNGKey(0)
    kx, k1, k2, k3, k4 = jax.random.split(key, 5)

    x = jax.random.normal(kx, (B, C, H, W), dtype=jnp.float32)
    # Deterministic synthetic conv params (PyTorch Conv2d(cin, cin, 1) shapes).
    w1 = jax.random.normal(k1, (C, C, 1, 1), dtype=jnp.float32) * 0.5
    b1 = jax.random.normal(k2, (C,), dtype=jnp.float32) * 0.1
    w2 = jax.random.normal(k3, (C, C, 1, 1), dtype=jnp.float32) * 0.5
    b2 = jax.random.normal(k4, (C,), dtype=jnp.float32) * 0.1

    out = fusion_layer(x, w1, b1, w2, b2)
    out = jax.block_until_ready(out)

    ref = _reference(x, w1, b1, w2, b2)
    assert out.shape == (B, C, H, W)
    assert jnp.allclose(out, ref, atol=1e-4, rtol=1e-4), "mismatch vs reference"

    print("KERNEL_OK")
</pallas_src>

<mosaic_0001>
module attributes {stable_mosaic.version = 11 : i64} {
  func.func @_fusion_kernel(%arg0: i32, %arg1: i32, %arg2: memref<1x4x256xf32, #tpu.memory_space<vmem>>, %arg3: memref<4x4xf32, #tpu.memory_space<vmem>>, %arg4: memref<4x1xf32, #tpu.memory_space<vmem>>, %arg5: memref<4x4xf32, #tpu.memory_space<vmem>>, %arg6: memref<4x1xf32, #tpu.memory_space<vmem>>, %arg7: memref<1x4x256xf32, #tpu.memory_space<vmem>>) attributes {dimension_semantics = [#tpu.dimension_semantics<parallel>, #tpu.dimension_semantics<parallel>], iteration_bounds = array<i64: 2, 1>, scalar_prefetch = 0 : i64, scratch_operands = 0 : i64, tpu.core_type = #tpu.core_type<tc>, window_params = [{transform_indices = @transform_0, window_bounds = array<i64: 1, 4, 256>}, {pipeline_mode = #tpu.pipeline_mode<synchronous>, transform_indices = @transform_1, window_bounds = array<i64: 4, 4>}, {pipeline_mode = #tpu.pipeline_mode<synchronous>, transform_indices = @transform_2, window_bounds = array<i64: 4, 1>}, {pipeline_mode = #tpu.pipeline_mode<synchronous>, transform_indices = @transform_3, window_bounds = array<i64: 4, 4>}, {pipeline_mode = #tpu.pipeline_mode<synchronous>, transform_indices = @transform_4, window_bounds = array<i64: 4, 1>}, {transform_indices = @transform_5, window_bounds = array<i64: 1, 4, 256>}]} {
    %c0 = arith.constant 0 : index
    %c0_0 = arith.constant 0 : index
    %c0_1 = arith.constant 0 : index
    %0 = vector.load %arg2[%c0, %c0_0, %c0_1] : memref<1x4x256xf32, #tpu.memory_space<vmem>>, vector<1x4x256xf32>
    %1 = vector.shape_cast %0 : vector<1x4x256xf32> to vector<4x256xf32>
    %c0_2 = arith.constant 0 : index
    %c0_3 = arith.constant 0 : index
    %2 = vector.load %arg3[%c0_2, %c0_3] : memref<4x4xf32, #tpu.memory_space<vmem>>, vector<4x4xf32>
    %c0_4 = arith.constant 0 : index
    %c0_5 = arith.constant 0 : index
    %3 = vector.load %arg4[%c0_4, %c0_5] : memref<4x1xf32, #tpu.memory_space<vmem>>, vector<4x1xf32>
    %4 = vector.extract_strided_slice %2 {offsets = [0, 0], sizes = [4, 1], strides = [1, 1]} : vector<4x4xf32> to vector<4x1xf32>
    %5 = vector.extract_strided_slice %1 {offsets = [0, 0], sizes = [1, 256], strides = [1, 1]} : vector<4x256xf32> to vector<1x256xf32>
    %6 = vector.broadcast %4 : vector<4x1xf32> to vector<4x256xf32>
    %7 = vector.broadcast %5 : vector<1x256xf32> to vector<4x256xf32>
    %8 = arith.mulf %6, %7 : vector<4x256xf32>
    %9 = vector.extract_strided_slice %2 {offsets = [0, 1], sizes = [4, 1], strides = [1, 1]} : vector<4x4xf32> to vector<4x1xf32>
    %10 = vector.extract_strided_slice %1 {offsets = [1, 0], sizes = [1, 256], strides = [1, 1]} : vector<4x256xf32> to vector<1x256xf32>
    %11 = vector.broadcast %9 : vector<4x1xf32> to vector<4x256xf32>
    %12 = vector.broadcast %10 : vector<1x256xf32> to vector<4x256xf32>
    %13 = arith.mulf %11, %12 : vector<4x256xf32>
    %14 = arith.addf %8, %13 : vector<4x256xf32>
    %15 = vector.extract_strided_slice %2 {offsets = [0, 2], sizes = [4, 1], strides = [1, 1]} : vector<4x4xf32> to vector<4x1xf32>
    %16 = vector.extract_strided_slice %1 {offsets = [2, 0], sizes = [1, 256], strides = [1, 1]} : vector<4x256xf32> to vector<1x256xf32>
    %17 = vector.broadcast %15 : vector<4x1xf32> to vector<4x256xf32>
    %18 = vector.broadcast %16 : vector<1x256xf32> to vector<4x256xf32>
    %19 = arith.mulf %17, %18 : vector<4x256xf32>
    %20 = arith.addf %14, %19 : vector<4x256xf32>
    %21 = vector.extract_strided_slice %2 {offsets = [0, 3], sizes = [4, 1], strides = [1, 1]} : vector<4x4xf32> to vector<4x1xf32>
    %22 = vector.extract_strided_slice %1 {offsets = [3, 0], sizes = [1, 256], strides = [1, 1]} : vector<4x256xf32> to vector<1x256xf32>
    %23 = vector.broadcast %21 : vector<4x1xf32> to vector<4x256xf32>
    %24 = vector.broadcast %22 : vector<1x256xf32> to vector<4x256xf32>
    %25 = arith.mulf %23, %24 : vector<4x256xf32>
    %26 = arith.addf %20, %25 : vector<4x256xf32>
    %27 = vector.broadcast %3 : vector<4x1xf32> to vector<4x256xf32>
    %28 = arith.addf %26, %27 : vector<4x256xf32>
    %cst = arith.constant 0.000000e+00 : f32
    %29 = vector.broadcast %cst : f32 to vector<4x256xf32>
    %30 = arith.maximumf %28, %29 : vector<4x256xf32>
    %c0_6 = arith.constant 0 : index
    %c0_7 = arith.constant 0 : index
    %31 = vector.load %arg5[%c0_6, %c0_7] : memref<4x4xf32, #tpu.memory_space<vmem>>, vector<4x4xf32>
    %c0_8 = arith.constant 0 : index
    %c0_9 = arith.constant 0 : index
    %32 = vector.load %arg6[%c0_8, %c0_9] : memref<4x1xf32, #tpu.memory_space<vmem>>, vector<4x1xf32>
    %33 = vector.extract_strided_slice %31 {offsets = [0, 0], sizes = [4, 1], strides = [1, 1]} : vector<4x4xf32> to vector<4x1xf32>
    %34 = vector.extract_strided_slice %30 {offsets = [0, 0], sizes = [1, 256], strides = [1, 1]} : vector<4x256xf32> to vector<1x256xf32>
    %35 = vector.broadcast %33 : vector<4x1xf32> to vector<4x256xf32>
    %36 = vector.broadcast %34 : vector<1x256xf32> to vector<4x256xf32>
    %37 = arith.mulf %35, %36 : vector<4x256xf32>
    %38 = vector.extract_strided_slice %31 {offsets = [0, 1], sizes = [4, 1], strides = [1, 1]} : vector<4x4xf32> to vector<4x1xf32>
    %39 = vector.extract_strided_slice %30 {offsets = [1, 0], sizes = [1, 256], strides = [1, 1]} : vector<4x256xf32> to vector<1x256xf32>
    %40 = vector.broadcast %38 : vector<4x1xf32> to vector<4x256xf32>
    %41 = vector.broadcast %39 : vector<1x256xf32> to vector<4x256xf32>
    %42 = arith.mulf %40, %41 : vector<4x256xf32>
    %43 = arith.addf %37, %42 : vector<4x256xf32>
    %44 = vector.extract_strided_slice %31 {offsets = [0, 2], sizes = [4, 1], strides = [1, 1]} : vector<4x4xf32> to vector<4x1xf32>
    %45 = vector.extract_strided_slice %30 {offsets = [2, 0], sizes = [1, 256], strides = [1, 1]} : vector<4x256xf32> to vector<1x256xf32>
    %46 = vector.broadcast %44 : vector<4x1xf32> to vector<4x256xf32>
    %47 = vector.broadcast %45 : vector<1x256xf32> to vector<4x256xf32>
    %48 = arith.mulf %46, %47 : vector<4x256xf32>
    %49 = arith.addf %43, %48 : vector<4x256xf32>
    %50 = vector.extract_strided_slice %31 {offsets = [0, 3], sizes = [4, 1], strides = [1, 1]} : vector<4x4xf32> to vector<4x1xf32>
    %51 = vector.extract_strided_slice %30 {offsets = [3, 0], sizes = [1, 256], strides = [1, 1]} : vector<4x256xf32> to vector<1x256xf32>
    %52 = vector.broadcast %50 : vector<4x1xf32> to vector<4x256xf32>
    %53 = vector.broadcast %51 : vector<1x256xf32> to vector<4x256xf32>
    %54 = arith.mulf %52, %53 : vector<4x256xf32>
    %55 = arith.addf %49, %54 : vector<4x256xf32>
    %56 = vector.broadcast %32 : vector<4x1xf32> to vector<4x256xf32>
    %57 = arith.addf %55, %56 : vector<4x256xf32>
    %58 = arith.addf %1, %57 : vector<4x256xf32>
    %c0_10 = arith.constant 0 : index
    %c0_11 = arith.constant 0 : index
    %c0_12 = arith.constant 0 : index
    %59 = vector.load %arg7[%c0_10, %c0_11, %c0_12] : memref<1x4x256xf32, #tpu.memory_space<vmem>>, vector<1x4x256xf32>
    %60 = vector.shape_cast %59 : vector<1x4x256xf32> to vector<4x256xf32>
    %61 = vector.shape_cast %58 : vector<4x256xf32> to vector<1x4x256xf32>
    tpu.vector_store %arg7[%c0_10, %c0_11, %c0_12], %61 {strides = array<i32>} : memref<1x4x256xf32, #tpu.memory_space<vmem>>, vector<1x4x256xf32>,
    return
  }
  func.func @transform_0(%arg0: i32, %arg1: i32) -> (i32, i32, i32) {
    %c0_i32 = arith.constant 0 : i32
    %c0_i32_0 = arith.constant 0 : i32
    return %arg0, %c0_i32, %arg1 : i32, i32, i32
  }
  func.func @transform_1(%arg0: i32, %arg1: i32) -> (i32, i32) {
    %c0_i32 = arith.constant 0 : i32
    %c0_i32_0 = arith.constant 0 : i32
    %c0_i32_1 = arith.constant 0 : i32
    return %c0_i32, %c0_i32_0 : i32, i32
  }
  func.func @transform_2(%arg0: i32, %arg1: i32) -> (i32, i32) {
    %c0_i32 = arith.constant 0 : i32
    %c0_i32_0 = arith.constant 0 : i32
    %c0_i32_1 = arith.constant 0 : i32
    return %c0_i32, %c0_i32_0 : i32, i32
  }
  func.func @transform_3(%arg0: i32, %arg1: i32) -> (i32, i32) {
    %c0_i32 = arith.constant 0 : i32
    %c0_i32_0 = arith.constant 0 : i32
    %c0_i32_1 = arith.constant 0 : i32
    return %c0_i32, %c0_i32_0 : i32, i32
  }
  func.func @transform_4(%arg0: i32, %arg1: i32) -> (i32, i32) {
    %c0_i32 = arith.constant 0 : i32
    %c0_i32_0 = arith.constant 0 : i32
    %c0_i32_1 = arith.constant 0 : i32
    return %c0_i32, %c0_i32_0 : i32, i32
  }
  func.func @transform_5(%arg0: i32, %arg1: i32) -> (i32, i32, i32) {
    %c0_i32 = arith.constant 0 : i32
    %c0_i32_0 = arith.constant 0 : i32
    return %arg0, %c0_i32, %arg1 : i32, i32, i32
  }
}

</mosaic_0001>

<llo_original>
// kernel: tpu_custom_call.1
$region0: #{tpu_custom_call.1}
  #allocation0 [shape = 'u32[]', space=smem, size = 0x4, offset = 0x4, fixed_abs, tag = 'smem constant byte address 0x4 - core index']
  #allocation1 [shape = 'u32[144,128]{1,0:T(1,128)}', space=vmem, size = 0x12000, scoped, tag = 'internal scratch']
  %s0 = inlined_call_operand.hbm [shape: f32[2,4,256], index: 0, kind: input, shape index: {}]
  %s1 = inlined_call_operand.vmem [shape: f32[4,4], index: 1, kind: input, shape index: {}]
  %s2 = inlined_call_operand.vmem [shape: f32[4,1], index: 2, kind: input, shape index: {}]
  %s3 = inlined_call_operand.vmem [shape: f32[4,4], index: 3, kind: input, shape index: {}]
  %s4 = inlined_call_operand.vmem [shape: f32[4,1], index: 4, kind: input, shape index: {}]
  %s5 = inlined_call_operand.hbm [shape: f32[2,4,256], index: 5, kind: output, shape index: {}]
  %s6 = sld [smem:[#allocation0]]
  $region57: #{tpu_custom_call.1} parent=0
    _
  %s8 = ssub.s32 1, %s6
  %s9 = scalar_select 0, %s8, %s6
  $region1: #{tpu_custom_call.1} parent=0
    #allocation2 [shape = 'u8[8192]{0}', space=vmem, size = 0x2000, scoped, tag = 'input window, operand 0']
    #allocation3 [shape = 's32[2]{0}', space=sflag, size = 0x8, scoped, tag = 'scoped memory for tpu_custom_call.1']
    #allocation4 [shape = 's32[2]{0}', space=sflag, size = 0x8, scoped, tag = 'scoped memory for tpu_custom_call.1']
    #allocation5 [shape = 'u8[8192]{0}', space=vmem, size = 0x2000, scoped, tag = 'output window, operand 0']
    %10 = vsyncpa [#allocation3], 0
    %s11 = scalar_lea.sflag [#allocation3], 1
    %12 = vsyncpa %s11, 0
    %13 = vsyncpa [#allocation4], 0
    %s14 = scalar_lea.sflag [#allocation4], 1
    %15 = vsyncpa %s14, 0
    loop: start=0, step=1, limit=4
    $region2: #{tpu_custom_call.1} parent=1 // loop_pre_header
      _
    $region3: #{tpu_custom_call.1} parent=1 // loop_header
      %s17 = sphi 0, %s21
      %p18 = scmp.ge.s32.totalorder %s17, 4
      %s24 = sphi 0, %s36
      %s25 = sphi 0, %s32
      %s26 = sphi 0, %s24
      %s27 = sphi 0, %s25
      %s28 = sphi 0, %s26
      %s29 = sphi 0, %s27
      %s41 = sphi 0, %s43
      %s44 = sphi 0, %s41
      %s45 = sphi 0, %s44
      %s61 = sphi 0, %s45
      %s65 = sphi 0, %s65
      %s67 = sphi 0, %s65
      %s68 = sphi 0, %s67
      %s82 = sphi 0, %s68
      %s86 = sphi 0, %s86
      %s88 = sphi 0, %s86
      %s89 = sphi 0, %s88
      %s103 = sphi 0, %s89
      %s107 = sphi 0, %s107
      %s109 = sphi 0, %s107
      %s110 = sphi 0, %s109
      %s124 = sphi 0, %s110
      %s128 = sphi 0, %s128
      %s130 = sphi 0, %s128
      %s131 = sphi 0, %s130
      %s145 = sphi 0, %s131
      %s153 = sphi 0, %s155
      %s156 = sphi 0, %s153
      %s157 = sphi 0, %s156
      %s173 = sphi 0, %s157
    $region4: #{tpu_custom_call.1} parent=1 // loop_header_branch
      %20 = sbr.rel (%p18) target = $region8
    $region5: #{tpu_custom_call.1} parent=1 // loop_body
      %s22 = ssub.s32 %s17, 1
      %s23 = ssub.s32 %s17, 2
      %s30 = sadd.s32 1, %s25
      %p31 = scmp.ge.s32.totalorder %s30, 1
      %s32 = scalar_select %p31, 0, %s30
      %s33 = sadd.s32 1, %s24
      %s34 = scalar_select %p31, %s33, %s24
      %p35 = scmp.ge.s32.totalorder %s34, 2
      %s36 = scalar_select %p35, 0, %s34
      %s37 = ssub.s32 %s24, %s36
      %s38 = ssub.s32 %s25, %s32
      %s39 = sor.u32 %s37, %s38
      %p40 = scmp.eq.s32.totalorder %s39, 0
      %s42 = sadd.s32 %s41, 1
      %s43 = scalar_select %p40, %s41, %s42
      %p46 = pneg %p40
      %p47 = scmp.eq.s32.totalorder %s17, 1
      %p48 = por %p46, %p47
      %p49 = scmp.ne.s32.totalorder %s41, %s44
      %p50 = scmp.eq.s32.totalorder %s17, 0
      %p51 = por %p49, %p50
      %p52 = scmp.ne.s32.totalorder %s41, %s44
      %p53 = scmp.eq.s32.totalorder %s22, 1
      %p54 = por %p52, %p53
      %p55 = scmp.ne.s32.totalorder %s44, %s45
      %p56 = scmp.eq.s32.totalorder %s22, 0
      %p57 = por %p55, %p56
      %p58 = scmp.ne.s32.totalorder %s44, %s45
      %p59 = scmp.eq.s32.totalorder %s23, 1
      %p60 = por %p58, %p59
      %p62 = scmp.ne.s32.totalorder %s45, %s61
      %p63 = scmp.eq.s32.totalorder %s23, 0
      %p64 = por %p62, %p63
      %s66 = sadd.s32 %s65, 1
      %p69 = scmp.eq.s32.totalorder %s17, 1
      %p70 = scmp.ne.s32.totalorder %s65, %s67
      %p71 = scmp.eq.s32.totalorder %s17, 0
      %p72 = por %p70, %p71
      %p73 = scmp.ne.s32.totalorder %s65, %s67
      %p74 = scmp.eq.s32.totalorder %s22, 1
      %p75 = por %p73, %p74
      %p76 = scmp.ne.s32.totalorder %s67, %s68
      %p77 = scmp.eq.s32.totalorder %s22, 0
      %p78 = por %p76, %p77
      %p79 = scmp.ne.s32.totalorder %s67, %s68
      %p80 = scmp.eq.s32.totalorder %s23, 1
      %p81 = por %p79, %p80
      %p83 = scmp.ne.s32.totalorder %s68, %s82
      %p84 = scmp.eq.s32.totalorder %s23, 0
      %p85 = por %p83, %p84
      %s87 = sadd.s32 %s86, 1
      %p90 = scmp.eq.s32.totalorder %s17, 1
      %p91 = scmp.ne.s32.totalorder %s86, %s88
      %p92 = scmp.eq.s32.totalorder %s17, 0
      %p93 = por %p91, %p92
      %p94 = scmp.ne.s32.totalorder %s86, %s88
      %p95 = scmp.eq.s32.totalorder %s22, 1
      %p96 = por %p94, %p95
      %p97 = scmp.ne.s32.totalorder %s88, %s89
      %p98 = scmp.eq.s32.totalorder %s22, 0
      %p99 = por %p97, %p98
      %p100 = scmp.ne.s32.totalorder %s88, %s89
      %p101 = scmp.eq.s32.totalorder %s23, 1
      %p102 = por %p100, %p101
      %p104 = scmp.ne.s32.totalorder %s89, %s103
      %p105 = scmp.eq.s32.totalorder %s23, 0
      %p106 = por %p104, %p105
      %s108 = sadd.s32 %s107, 1
      %p111 = scmp.eq.s32.totalorder %s17, 1
      %p112 = scmp.ne.s32.totalorder %s107, %s109
      %p113 = scmp.eq.s32.totalorder %s17, 0
      %p114 = por %p112, %p113
      %p115 = scmp.ne.s32.totalorder %s107, %s109
      %p116 = scmp.eq.s32.totalorder %s22, 1
      %p117 = por %p115, %p116
      %p118 = scmp.ne.s32.totalorder %s109, %s110
      %p119 = scmp.eq.s32.totalorder %s22, 0
      %p120 = por %p118, %p119
      %p121 = scmp.ne.s32.totalorder %s109, %s110
      %p122 = scmp.eq.s32.totalorder %s23, 1
      %p123 = por %p121, %p122
      %p125 = scmp.ne.s32.totalorder %s110, %s124
      %p126 = scmp.eq.s32.totalorder %s23, 0
      %p127 = por %p125, %p126
      %s129 = sadd.s32 %s128, 1
      %p132 = scmp.eq.s32.totalorder %s17, 1
      %p133 = scmp.ne.s32.totalorder %s128, %s130
      %p134 = scmp.eq.s32.totalorder %s17, 0
      %p135 = por %p133, %p134
      %p136 = scmp.ne.s32.totalorder %s128, %s130
      %p137 = scmp.eq.s32.totalorder %s22, 1
      %p138 = por %p136, %p137
      %p139 = scmp.ne.s32.totalorder %s130, %s131
      %p140 = scmp.eq.s32.totalorder %s22, 0
      %p141 = por %p139, %p140
      %p142 = scmp.ne.s32.totalorder %s130, %s131
      %p143 = scmp.eq.s32.totalorder %s23, 1
      %p144 = por %p142, %p143
      %p146 = scmp.ne.s32.totalorder %s131, %s145
      %p147 = scmp.eq.s32.totalorder %s23, 0
      %p148 = por %p146, %p147
      %s149 = ssub.s32 %s24, %s36
      %s150 = ssub.s32 %s25, %s32
      %s151 = sor.u32 %s149, %s150
      %p152 = scmp.eq.s32.totalorder %s151, 0
      %s154 = sadd.s32 %s153, 1
      %s155 = scalar_select %p152, %s153, %s154
      %p158 = pneg %p152
      %p159 = scmp.eq.s32.totalorder %s17, 1
      %p160 = por %p158, %p159
      %p161 = scmp.ne.s32.totalorder %s153, %s156
      %p162 = scmp.eq.s32.totalorder %s17, 0
      %p163 = por %p161, %p162
      %p164 = scmp.ne.s32.totalorder %s153, %s156
      %p165 = scmp.eq.s32.totalorder %s22, 1
      %p166 = por %p164, %p165
      %p167 = scmp.ne.s32.totalorder %s156, %s157
      %p168 = scmp.eq.s32.totalorder %s22, 0
      %p169 = por %p167, %p168
      %p170 = scmp.ne.s32.totalorder %s156, %s157
      %p171 = scmp.eq.s32.totalorder %s23, 1
      %p172 = por %p170, %p171
      %p174 = scmp.ne.s32.totalorder %s157, %s173
      %p175 = scmp.eq.s32.totalorder %s23, 0
      %p176 = por %p174, %p175
      %p177 = scmp.le.s32.totalorder 1, %s17
      %p178 = scmp.lt.s32.totalorder %s17, 3
      %p179 = pnand %p177, %p178
      %p180 = pneg %p179
      // Predicated region
      $region9: #{tpu_custom_call.1} parent=5 // pred_check
        _
      $region10: #{tpu_custom_call.1} parent=5 // pred_check_branch
        %182 = sbr.rel (%p179) target = $region12
      $region11: #{tpu_custom_call.1} parent=5 // pred_region
        %s183 = ssub.s32 %s17, 1
        // Predicated region
        $region13: #{tpu_custom_call.1} parent=11 // pred_check
          %p184 = pneg %p78
        $region14: #{tpu_custom_call.1} parent=11 // pred_check_branch
          %186 = sbr.rel (%p184) target = $region16
        $region15: #{tpu_custom_call.1} parent=11 // pred_region
          _
        $region16: #{tpu_custom_call.1} parent=11 // pred_fallthru
          _
        // Predicated region
        $region17: #{tpu_custom_call.1} parent=11 // pred_check
          %p187 = pneg %p99
        $region18: #{tpu_custom_call.1} parent=11 // pred_check_branch
          %189 = sbr.rel (%p187) target = $region20
        $region19: #{tpu_custom_call.1} parent=11 // pred_region
          _
        $region20: #{tpu_custom_call.1} parent=11 // pred_fallthru
          _
        // Predicated region
        $region21: #{tpu_custom_call.1} parent=11 // pred_check
          %p190 = pneg %p120
        $region22: #{tpu_custom_call.1} parent=11 // pred_check_branch
          %192 = sbr.rel (%p190) target = $region24
        $region23: #{tpu_custom_call.1} parent=11 // pred_region
          _
        $region24: #{tpu_custom_call.1} parent=11 // pred_fallthru
          _
        // Predicated region
        $region25: #{tpu_custom_call.1} parent=11 // pred_check
          %p193 = pneg %p141
        $region26: #{tpu_custom_call.1} parent=11 // pred_check_branch
          %195 = sbr.rel (%p193) target = $region28
        $region27: #{tpu_custom_call.1} parent=11 // pred_region
          _
        $region28: #{tpu_custom_call.1} parent=11 // pred_fallthru
          _
      $region12: #{tpu_custom_call.1} parent=5 // pred_fallthru
        _
      %p196 = scmp.lt.s32.totalorder %s17, 2
      // Predicated region
      $region29: #{tpu_custom_call.1} parent=5 // pred_check
        %p197 = pneg %p196
      $region30: #{tpu_custom_call.1} parent=5 // pred_check_branch
        %199 = sbr.rel (%p197) target = $region32
      $region31: #{tpu_custom_call.1} parent=5 // pred_region
        // Predicated region
        $region33: #{tpu_custom_call.1} parent=31 // pred_check
          %p200 = pneg %p51
        $region34: #{tpu_custom_call.1} parent=31 // pred_check_branch
          %202 = sbr.rel (%p200) target = $region36
        $region35: #{tpu_custom_call.1} parent=31 // pred_region
          %s203 = sand.u32 %s41, 1
          %s204 = scalar_lea.sflag [#allocation3], %s203
          %s205 = sand.u32 %s41, 1
          %s206 = smul.addr %s205, 8
          %s207 = scalar_lea.vmem [#allocation2], %s206
          %s208 = smul.u32 2, %s25
          %s210 = ssub.s32 128, 128
          %211 = vsyncadd %s204, %s210
          %s212 = smul.addr %s24, 2
          %s213 = sadd.s32 %s208, %s212
          %s214 = smul.addr %s213, 64
          %s215 = scalar_lea.hbm %s0, %s214
          %s217 = sshll.u32 %s207, 4
          %s218 = int_to_ptr.vmem [resolvable:$true] %s217
          %220 = dma.hbm_to_vmem [thread:$0]  %s215, 128, %s218, %s204
        $region36: #{tpu_custom_call.1} parent=31 // pred_fallthru
          _
      $region32: #{tpu_custom_call.1} parent=5 // pred_fallthru
        _
      %p221 = scmp.le.s32.totalorder 1, %s17
      %p222 = scmp.lt.s32.totalorder %s17, 3
      %p223 = pnand %p221, %p222
      %p224 = pneg %p223
      // Predicated region
      $region37: #{tpu_custom_call.1} parent=5 // pred_check
        _
      $region38: #{tpu_custom_call.1} parent=5 // pred_check_branch
        %226 = sbr.rel (%p223) target = $region40
      $region39: #{tpu_custom_call.1} parent=5 // pred_region
        %s227 = ssub.s32 %s17, 1
        %s228 = sand.u32 %s44, 1
        %s229 = scalar_lea.sflag [#allocation3], %s228
        %s230 = sand.u32 %s44, 1
        %s231 = smul.addr %s230, 8
        %s232 = scalar_lea.vmem [#allocation2], %s231
        // Predicated region
        $region41: #{tpu_custom_call.1} parent=39 // pred_check
          %p233 = pneg %p57
        $region42: #{tpu_custom_call.1} parent=39 // pred_check_branch
          %235 = sbr.rel (%p233) target = $region44
        $region43: #{tpu_custom_call.1} parent=39 // pred_region
          %236 = dma.done %s229, 128
        $region44: #{tpu_custom_call.1} parent=39 // pred_fallthru
          _
        %s237 = sand.u32 %s44, 1
        %s238 = scalar_lea.sflag [#allocation3], %s237
        %s239 = sand.u32 %s44, 1
        %s240 = smul.addr %s239, 8
        %s241 = scalar_lea.vmem [#allocation2], %s240
        %p242 = pneg %p57
        %p243 = pneg %p54
        %p244 = pneg %p78
        %p245 = pneg %p75
        %p246 = pneg %p99
        %p247 = pneg %p96
        %p248 = pneg %p120
        %p249 = pneg %p117
        %p250 = pneg %p141
        %p251 = pneg %p138
        %p252 = pneg %p169
        %p253 = pneg %p166
        %s254 = sand.u32 %s156, 1
        %s255 = scalar_lea.sflag [#allocation4], %s254
        %s256 = sand.u32 %s156, 1
        %s257 = smul.addr %s256, 8
        %s258 = scalar_lea.vmem [#allocation5], %s257
        %s259 = smul.u32 2, %s27
        %s260 = smul.u32 2, %s27
        %v261 = vld [vmem:[%s232] sm:$0xff]
        %v262 = vld [vmem:[%s1] sm:$0xf]
        %v263 = vld [vmem:[%s2] sm:$0xf]
        %265 = vset.pattern.permute.xlu0 0
        %266 = vperm.xlu0 %265, %v262
        %v267 = vpop.permute.xlu0 %266
        %v270 = vlaneseq
        %v271 = vshrl.u32 %v270, 7
        %v272 = vsub.s32 0, %v271
        %v273 = vrot.slane %v261, %v272
        %v274 = vlaneseq
        %v275 = vshrl.u32 %v274, 7
        %v276 = vsub.s32 4, %v275
        %v277 = vrot.slane %v261, %v276
        %v280 = vlaneseq
        %v281 = vshrl.u32 %v280, 7
        %v282 = vsub.s32 0, %v281
        %v283 = vrot.slane %v273, %v282
        %v284 = vlaneseq
        %v285 = vshrl.u32 %v284, 7
        %v286 = vsub.s32 0, %v285
        %v287 = vrot.slane %v277, %v286
        %v288 = vmul.f32 %v267, %v283
        %v289 = vmul.f32 %v267, %v287
        %290 = vset.pattern.permute.xlu0 1
        %291 = vperm.xlu0 %290, %v262
        %v292 = vpop.permute.xlu0 %291
        %v294 = vlaneseq
        %v295 = vshrl.u32 %v294, 7
        %v296 = vsub.s32 1, %v295
        %v297 = vrot.slane %v261, %v296
        %v298 = vlaneseq
        %v299 = vshrl.u32 %v298, 7
        %v300 = vsub.s32 5, %v299
        %v301 = vrot.slane %v261, %v300
        %v304 = vlaneseq
        %v305 = vshrl.u32 %v304, 7
        %v306 = vsub.s32 1, %v305
        %v307 = vrot.slane %v297, %v306
        %v308 = vlaneseq
        %v309 = vshrl.u32 %v308, 7
        %v310 = vsub.s32 1, %v309
        %v311 = vrot.slane %v301, %v310
        %v312 = vmul.f32 %v292, %v307
        %v313 = vmul.f32 %v292, %v311
        %v314 = vadd.f32 %v288, %v312
        %v315 = vadd.f32 %v289, %v313
        %316 = vset.pattern.permute.xlu0 2
        %317 = vperm.xlu0 %316, %v262
        %v318 = vpop.permute.xlu0 %317
        %v320 = vlaneseq
        %v321 = vshrl.u32 %v320, 7
        %v322 = vsub.s32 2, %v321
        %v323 = vrot.slane %v261, %v322
        %v324 = vlaneseq
        %v325 = vshrl.u32 %v324, 7
        %v326 = vsub.s32 6, %v325
        %v327 = vrot.slane %v261, %v326
        %v330 = vlaneseq
        %v331 = vshrl.u32 %v330, 7
        %v332 = vsub.s32 2, %v331
        %v333 = vrot.slane %v323, %v332
        %v334 = vlaneseq
        %v335 = vshrl.u32 %v334, 7
        %v336 = vsub.s32 2, %v335
        %v337 = vrot.slane %v327, %v336
        %v338 = vmul.f32 %v318, %v333
        %v339 = vmul.f32 %v318, %v337
        %v340 = vadd.f32 %v314, %v338
        %v341 = vadd.f32 %v315, %v339
        %342 = vset.pattern.permute.xlu0 3
        %343 = vperm.xlu0 %342, %v262
        %v344 = vpop.permute.xlu0 %343
        %v346 = vlaneseq
        %v347 = vshrl.u32 %v346, 7
        %v348 = vsub.s32 3, %v347
        %v349 = vrot.slane %v261, %v348
        %v350 = vlaneseq
        %v351 = vshrl.u32 %v350, 7
        %v352 = vsub.s32 7, %v351
        %v353 = vrot.slane %v261, %v352
        %v356 = vlaneseq
        %v357 = vshrl.u32 %v356, 7
        %v358 = vsub.s32 3, %v357
        %v359 = vrot.slane %v349, %v358
        %v360 = vlaneseq
        %v361 = vshrl.u32 %v360, 7
        %v362 = vsub.s32 3, %v361
        %v363 = vrot.slane %v353, %v362
        %v364 = vmul.f32 %v344, %v359
        %v365 = vmul.f32 %v344, %v363
        %v366 = vadd.f32 %v340, %v364
        %v367 = vadd.f32 %v341, %v365
        %369 = vset.pattern.permute.xlu0 0
        %370 = vperm.xlu0 %369, %v263
        %v371 = vpop.permute.xlu0 %370
        %v373 = vadd.f32 %v366, %v371
        %v374 = vadd.f32 %v367, %v371
        %v375 = vmax.f32 %v373, 0.0
        %v376 = vmax.f32 %v374, 0.0
        %v377 = vld [vmem:[%s3] sm:$0xf]
        %v378 = vld [vmem:[%s4] sm:$0xf]
        %380 = vset.pattern.permute.xlu0 0
        %381 = vperm.xlu0 %380, %v377
        %v382 = vpop.permute.xlu0 %381
        %v384 = vlaneseq
        %v385 = vshrl.u32 %v384, 7
        %v386 = vsub.s32 0, %v385
        %v387 = vrot.slane %v375, %v386
        %v388 = vlaneseq
        %v389 = vshrl.u32 %v388, 7
        %v390 = vsub.s32 0, %v389
        %v391 = vrot.slane %v376, %v390
        %v392 = vmul.f32 %v382, %v387
        %v393 = vmul.f32 %v382, %v391
        %394 = vset.pattern.permute.xlu0 1
        %395 = vperm.xlu0 %394, %v377
        %v396 = vpop.permute.xlu0 %395
        %v398 = vlaneseq
        %v399 = vshrl.u32 %v398, 7
        %v400 = vsub.s32 1, %v399
        %v401 = vrot.slane %v375, %v400
        %v402 = vlaneseq
        %v403 = vshrl.u32 %v402, 7
        %v404 = vsub.s32 1, %v403
        %v405 = vrot.slane %v376, %v404
        %v406 = vmul.f32 %v396, %v401
        %v407 = vmul.f32 %v396, %v405
        %v408 = vadd.f32 %v392, %v406
        %v409 = vadd.f32 %v393, %v407
        %410 = vset.pattern.permute.xlu0 2
        %411 = vperm.xlu0 %410, %v377
        %v412 = vpop.permute.xlu0 %411
        %v414 = vlaneseq
        %v415 = vshrl.u32 %v414, 7
        %v416 = vsub.s32 2, %v415
        %v417 = vrot.slane %v375, %v416
        %v418 = vlaneseq
        %v419 = vshrl.u32 %v418, 7
        %v420 = vsub.s32 2, %v419
        %v421 = vrot.slane %v376, %v420
        %v422 = vmul.f32 %v412, %v417
        %v423 = vmul.f32 %v412, %v421
        %v424 = vadd.f32 %v408, %v422
        %v425 = vadd.f32 %v409, %v423
        %426 = vset.pattern.permute.xlu0 3
        %427 = vperm.xlu0 %426, %v377
        %v428 = vpop.permute.xlu0 %427
        %v430 = vlaneseq
        %v431 = vshrl.u32 %v430, 7
        %v432 = vsub.s32 3, %v431
        %v433 = vrot.slane %v375, %v432
        %v434 = vlaneseq
        %v435 = vshrl.u32 %v434, 7
        %v436 = vsub.s32 3, %v435
        %v437 = vrot.slane %v376, %v436
        %v438 = vmul.f32 %v428, %v433
        %v439 = vmul.f32 %v428, %v437
        %v440 = vadd.f32 %v424, %v438
        %v441 = vadd.f32 %v425, %v439
        %443 = vset.pattern.permute.xlu0 0
        %444 = vperm.xlu0 %443, %v378
        %v445 = vpop.permute.xlu0 %444
        %v447 = vadd.f32 %v440, %v445
        %v448 = vadd.f32 %v441, %v445
        %v451 = vcombine.low %v447, %v448
        %v453 = vadd.f32 %v261, %v451
        %454 = vst [vmem:[%s258] sm:$0xff] %v453
        %s455 = sand.u32 %s156, 1
        %s456 = scalar_lea.sflag [#allocation4], %s455
        %s457 = sand.u32 %s156, 1
        %s458 = smul.addr %s457, 8
        %s459 = scalar_lea.vmem [#allocation5], %s458
        // Predicated region
        $region45: #{tpu_custom_call.1} parent=39 // pred_check
          %p460 = pneg %p166
        $region46: #{tpu_custom_call.1} parent=39 // pred_check_branch
          %462 = sbr.rel (%p460) target = $region48
        $region47: #{tpu_custom_call.1} parent=39 // pred_region
          %s463 = smul.u32 2, %s27
          %s465 = ssub.s32 128, 128
          %466 = vsyncadd %s456, %s465
          %s467 = smul.addr %s26, 2
          %s468 = sadd.s32 %s463, %s467
          %s469 = smul.addr %s468, 64
          %s470 = scalar_lea.hbm %s5, %s469
          %s472 = sshll.u32 %s459, 4
          %s473 = int_to_ptr.vmem [resolvable:$true] %s472
          %475 = dma.vmem_to_hbm [thread:$0]  %s473, 128, %s470, %s456
        $region48: #{tpu_custom_call.1} parent=39 // pred_fallthru
          _
      $region40: #{tpu_custom_call.1} parent=5 // pred_fallthru
        _
      %p476 = scmp.le.s32.totalorder 2, %s17
      // Predicated region
      $region49: #{tpu_custom_call.1} parent=5 // pred_check
        %p477 = pneg %p476
      $region50: #{tpu_custom_call.1} parent=5 // pred_check_branch
        %479 = sbr.rel (%p477) target = $region52
      $region51: #{tpu_custom_call.1} parent=5 // pred_region
        %s480 = ssub.s32 %s17, 2
        // Predicated region
        $region53: #{tpu_custom_call.1} parent=51 // pred_check
          %p481 = pneg %p172
        $region54: #{tpu_custom_call.1} parent=51 // pred_check_branch
          %483 = sbr.rel (%p481) target = $region56
        $region55: #{tpu_custom_call.1} parent=51 // pred_region
          %s484 = sand.u32 %s157, 1
          %s485 = scalar_lea.sflag [#allocation4], %s484
          %s486 = sand.u32 %s157, 1
          %s487 = smul.addr %s486, 8
          %s488 = scalar_lea.vmem [#allocation5], %s487
          %489 = dma.done %s485, 128
        $region56: #{tpu_custom_call.1} parent=51 // pred_fallthru
          _
      $region52: #{tpu_custom_call.1} parent=5 // pred_fallthru
        _
    $region6: #{tpu_custom_call.1} parent=1 // loop_footer
      %s21 = sadd.s32 1, %s17
    $region7: #{tpu_custom_call.1} parent=1 // loop_footer_branch
      %16 = sbr.rel target = $region3
    $region8: #{tpu_custom_call.1} parent=1 // loop_exit
      _
    %490 = vsyncpa [#allocation3], 1
    %s491 = scalar_lea.sflag [#allocation3], 1
    %492 = vsyncpa %s491, 1
    %493 = vsyncpa [#allocation4], 1
    %s494 = scalar_lea.sflag [#allocation4], 1
    %495 = vsyncpa %s494, 1

</llo_original>
